<compile_context>
chip_gen: v7x
topology: tpu7x:2x2x1
jax: 0.10.0
libtpu: 0.0.40
codegen_flags: <defaults>
</compile_context>

<pallas_src>
import jax
import jax.numpy as jnp
from jax.experimental import pallas as pl
from jax.experimental.pallas import tpu as pltpu

IN_DIM = 4
HID_DIM = 20
OUT_DIM = 2
HID_PAD = 24           # hidden dim padded to a sublane multiple (20 -> 24)
BIAS_ROW = HID_DIM     # constant-1 hidden row used to fold the layer-2 bias
N_ITEMS = IN_DIM + 2   # 4 W1 columns + b1 + (w2[0]-w2[1]) row
LANES = 128            # vreg lane width
MAX_TB = 2048          # widest batch tile per grid step (16 x 128-lane columns)


def policy_kernel(p_ref, xt_ref, o_ref):
    """p_ref : (N_ITEMS, HID_PAD, LANES) packed, lane-replicated parameters
       xt_ref: (IN_DIM, TB)              one batch tile, batch on the lane axis
       o_ref : (OUT_DIM, TB)             row 0 = p(action 0), row 1 = p(action 1)"""
    n_cols = xt_ref.shape[-1] // LANES

    # Hoist the small 128-wide parameter tiles once; reused for every column.
    w1_cols = [p_ref[i] for i in range(IN_DIM)]      # (HID_PAD, LANES) each
    b1 = p_ref[IN_DIM]                               # b1 (padded; row 20 == 1.0)
    w2_diff = p_ref[IN_DIM + 1]                      # w2[0]-w2[1] (+ b2 diff on row 20)

    # Static full unroll over the 128-lane columns of this batch tile
    # (n_cols <= MAX_TB // LANES == 16), so every slice below is static.
    for c in range(n_cols):
        lo, hi = c * LANES, (c + 1) * LANES

        # Layer 1: Linear(4 -> 20) + ReLU as 4 VPU broadcast-FMAs (no MXU).
        h = b1
        for i in range(IN_DIM):
            h = h + w1_cols[i] * xt_ref[i:i + 1, lo:hi]   # (1,128) sublane-bcast
        h = jnp.maximum(h, 0.0)                           # (HID_PAD, 128)

        # Layer 2: for a 2-class softmax only the logit difference matters.
        d = jnp.sum(w2_diff * h, axis=0, keepdims=True)   # (1, 128) = logit0 - logit1

        # Exact, numerically stable 2-class softmax via the EUP tanh path:
        # sigmoid(d) = 0.5 * tanh(d / 2) + 0.5   (no approx reciprocal).
        p0 = 0.5 * jnp.tanh(0.5 * d) + 0.5

        # One lane-dense (2, 128) store per column instead of two masked ones.
        o_ref[:, lo:hi] = jnp.concatenate([p0, 1.0 - p0], axis=0)


def pack_params(w1, b1, w2, b2):
    """Fold + pad + lane-replicate PyTorch-layout params
    (w1:(20,4), b1:(20,), w2:(2,20), b2:(2,)) into one fixed
    (N_ITEMS, HID_PAD, LANES) float32 slab, independent of the batch tile."""
    def pad(v):
        return jnp.zeros((HID_PAD,), jnp.float32).at[:HID_DIM].set(v)

    items = [pad(w1[:, i]) for i in range(IN_DIM)]                     # W1 columns
    items.append(pad(b1).at[BIAS_ROW].set(1.0))                        # b1 + const-1 row
    items.append(pad(w2[0] - w2[1]).at[BIAS_ROW].set(b2[0] - b2[1]))   # logit-diff row
    slab = jnp.stack(items, axis=0)                                    # (6, HID_PAD)
    return jnp.broadcast_to(slab[:, :, None],
                            (N_ITEMS, HID_PAD, LANES)).astype(jnp.float32)


def policy_forward(xt, packed_params):
    """xt: (IN_DIM, B) float32 observations (batch on the lane axis).
    Returns (OUT_DIM, B) action probabilities (row a = p(action a))."""
    in_dim, B = xt.shape
    assert in_dim == IN_DIM
    tb = min(pl.cdiv(B, LANES) * LANES, MAX_TB)   # single grid step for B <= MAX_TB
    nb = pl.cdiv(B, tb)
    b_pad = nb * tb

    if b_pad != B:   # only pay for padding when the batch is not lane-aligned
        xt_in = jnp.zeros((IN_DIM, b_pad), jnp.float32).at[:, :B].set(
            xt.astype(jnp.float32))
    else:
        xt_in = xt.astype(jnp.float32)

    out = pl.pallas_call(
        policy_kernel,
        out_shape=jax.ShapeDtypeStruct((OUT_DIM, b_pad), jnp.float32),
        grid=(nb,),
        in_specs=[
            # Fixed 128-lane parameter slab, constant block index -> one DMA,
            # VMEM footprint independent of the batch tile width.
            pl.BlockSpec((N_ITEMS, HID_PAD, LANES), lambda b: (0, 0, 0)),
            pl.BlockSpec((IN_DIM, tb), lambda b: (0, b)),
        ],
        out_specs=pl.BlockSpec((OUT_DIM, tb), lambda b: (0, b)),
        compiler_params=pltpu.CompilerParams(
            dimension_semantics=("parallel",)),
    )(packed_params, xt_in)
    return out if b_pad == B else out[:, :B]


def init_params(key):
    """PyTorch nn.Linear default init: U(-1/sqrt(fan_in), 1/sqrt(fan_in)),
    stored in PyTorch layout (out_features, in_features)."""
    k1, k2, k3, k4 = jax.random.split(key, 4)
    bound1 = 1.0 / jnp.sqrt(4.0)
    bound2 = 1.0 / jnp.sqrt(20.0)
    w1 = jax.random.uniform(k1, (HID_DIM, IN_DIM), jnp.float32, -bound1, bound1)
    b1 = jax.random.uniform(k2, (HID_DIM,), jnp.float32, -bound1, bound1)
    w2 = jax.random.uniform(k3, (OUT_DIM, HID_DIM), jnp.float32, -bound2, bound2)
    b2 = jax.random.uniform(k4, (OUT_DIM,), jnp.float32, -bound2, bound2)
    return w1, b1, w2, b2


def reference_forward(x, w1, b1, w2, b2):
    """Pure-JAX reference matching the PyTorch module exactly. x: (B, 4)."""
    h = jnp.maximum(x @ w1.T + b1, 0.0)
    logits = h @ w2.T + b2
    return jax.nn.softmax(logits, axis=1)


if __name__ == "__main__":
    key = jax.random.PRNGKey(0)
    kp, kx = jax.random.split(key)
    w1, b1, w2, b2 = init_params(kp)
    packed = pack_params(w1, b1, w2, b2)

    # Struct-of-arrays CartPole observation batch (vectorized envs): already
    # in the (features, batch) layout the kernel consumes, so the wrapper does
    # no transposes or pads at this size.
    B = 256
    xt = jax.random.normal(kx, (IN_DIM, B), jnp.float32)

    probs = jax.block_until_ready(policy_forward(xt, packed))   # (2, B)

    ref = reference_forward(xt.T, w1, b1, w2, b2)                # (B, 2)

    assert probs.shape == (OUT_DIM, B)
    row_sums = jnp.sum(probs, axis=0)
    assert bool(jnp.all(jnp.abs(row_sums - 1.0) < 1e-5))
    # Exact tanh-based sigmoid -> matches the softmax reference tightly.
    assert bool(jnp.max(jnp.abs(probs - ref.T)) < 1e-5)
    print("KERNEL_OK")
</pallas_src>

<mosaic_0001>
module attributes {stable_mosaic.version = 11 : i64} {
  func.func @policy_kernel(%arg0: i32, %arg1: memref<6x24x128xf32, #tpu.memory_space<vmem>>, %arg2: memref<4x256xf32, #tpu.memory_space<vmem>>, %arg3: memref<2x256xf32, #tpu.memory_space<vmem>>) attributes {dimension_semantics = [#tpu.dimension_semantics<parallel>], iteration_bounds = array<i64: 1>, scalar_prefetch = 0 : i64, scratch_operands = 0 : i64, tpu.core_type = #tpu.core_type<tc>, window_params = [{pipeline_mode = #tpu.pipeline_mode<synchronous>, transform_indices = @transform_0, window_bounds = array<i64: 6, 24, 128>}, {transform_indices = @transform_1, window_bounds = array<i64: 4, 256>}, {transform_indices = @transform_2, window_bounds = array<i64: 2, 256>}]} {
    %c0 = arith.constant 0 : index
    %c0_0 = arith.constant 0 : index
    %c0_1 = arith.constant 0 : index
    %0 = vector.load %arg1[%c0, %c0_0, %c0_1] : memref<6x24x128xf32, #tpu.memory_space<vmem>>, vector<1x24x128xf32>
    %1 = vector.shape_cast %0 : vector<1x24x128xf32> to vector<24x128xf32>
    %c1 = arith.constant 1 : index
    %c0_2 = arith.constant 0 : index
    %c0_3 = arith.constant 0 : index
    %2 = vector.load %arg1[%c1, %c0_2, %c0_3] : memref<6x24x128xf32, #tpu.memory_space<vmem>>, vector<1x24x128xf32>
    %3 = vector.shape_cast %2 : vector<1x24x128xf32> to vector<24x128xf32>
    %c2 = arith.constant 2 : index
    %c0_4 = arith.constant 0 : index
    %c0_5 = arith.constant 0 : index
    %4 = vector.load %arg1[%c2, %c0_4, %c0_5] : memref<6x24x128xf32, #tpu.memory_space<vmem>>, vector<1x24x128xf32>
    %5 = vector.shape_cast %4 : vector<1x24x128xf32> to vector<24x128xf32>
    %c3 = arith.constant 3 : index
    %c0_6 = arith.constant 0 : index
    %c0_7 = arith.constant 0 : index
    %6 = vector.load %arg1[%c3, %c0_6, %c0_7] : memref<6x24x128xf32, #tpu.memory_space<vmem>>, vector<1x24x128xf32>
    %7 = vector.shape_cast %6 : vector<1x24x128xf32> to vector<24x128xf32>
    %c4 = arith.constant 4 : index
    %c0_8 = arith.constant 0 : index
    %c0_9 = arith.constant 0 : index
    %8 = vector.load %arg1[%c4, %c0_8, %c0_9] : memref<6x24x128xf32, #tpu.memory_space<vmem>>, vector<1x24x128xf32>
    %9 = vector.shape_cast %8 : vector<1x24x128xf32> to vector<24x128xf32>
    %c5 = arith.constant 5 : index
    %c0_10 = arith.constant 0 : index
    %c0_11 = arith.constant 0 : index
    %10 = vector.load %arg1[%c5, %c0_10, %c0_11] : memref<6x24x128xf32, #tpu.memory_space<vmem>>, vector<1x24x128xf32>
    %11 = vector.shape_cast %10 : vector<1x24x128xf32> to vector<24x128xf32>
    %c0_12 = arith.constant 0 : index
    %c0_13 = arith.constant 0 : index
    %12 = vector.load %arg2[%c0_12, %c0_13] : memref<4x256xf32, #tpu.memory_space<vmem>>, vector<1x128xf32>
    %13 = vector.broadcast %12 : vector<1x128xf32> to vector<24x128xf32>
    %14 = arith.mulf %1, %13 : vector<24x128xf32>
    %15 = arith.addf %9, %14 : vector<24x128xf32>
    %c1_14 = arith.constant 1 : index
    %c0_15 = arith.constant 0 : index
    %16 = vector.load %arg2[%c1_14, %c0_15] : memref<4x256xf32, #tpu.memory_space<vmem>>, vector<1x128xf32>
    %17 = vector.broadcast %16 : vector<1x128xf32> to vector<24x128xf32>
    %18 = arith.mulf %3, %17 : vector<24x128xf32>
    %19 = arith.addf %15, %18 : vector<24x128xf32>
    %c2_16 = arith.constant 2 : index
    %c0_17 = arith.constant 0 : index
    %20 = vector.load %arg2[%c2_16, %c0_17] : memref<4x256xf32, #tpu.memory_space<vmem>>, vector<1x128xf32>
    %21 = vector.broadcast %20 : vector<1x128xf32> to vector<24x128xf32>
    %22 = arith.mulf %5, %21 : vector<24x128xf32>
    %23 = arith.addf %19, %22 : vector<24x128xf32>
    %c3_18 = arith.constant 3 : index
    %c0_19 = arith.constant 0 : index
    %24 = vector.load %arg2[%c3_18, %c0_19] : memref<4x256xf32, #tpu.memory_space<vmem>>, vector<1x128xf32>
    %25 = vector.broadcast %24 : vector<1x128xf32> to vector<24x128xf32>
    %26 = arith.mulf %7, %25 : vector<24x128xf32>
    %27 = arith.addf %23, %26 : vector<24x128xf32>
    %cst = arith.constant 0.000000e+00 : f32
    %28 = vector.broadcast %cst : f32 to vector<24x128xf32>
    %29 = arith.maximumf %27, %28 : vector<24x128xf32>
    %30 = arith.mulf %11, %29 : vector<24x128xf32>
    %cst_20 = arith.constant dense<0.000000e+00> : vector<128xf32>
    %31 = vector.multi_reduction <add>, %30, %cst_20 [0] : vector<24x128xf32> to vector<128xf32>
    %32 = vector.shape_cast %31 : vector<128xf32> to vector<1x128xf32>
    %cst_21 = arith.constant 5.000000e-01 : f32
    %33 = vector.broadcast %cst_21 : f32 to vector<1x128xf32>
    %34 = arith.mulf %33, %32 : vector<1x128xf32>
    %35 = math.tanh %34 : vector<1x128xf32>
    %cst_22 = arith.constant 5.000000e-01 : f32
    %36 = vector.broadcast %cst_22 : f32 to vector<1x128xf32>
    %37 = arith.mulf %36, %35 : vector<1x128xf32>
    %cst_23 = arith.constant 5.000000e-01 : f32
    %38 = vector.broadcast %cst_23 : f32 to vector<1x128xf32>
    %39 = arith.addf %37, %38 : vector<1x128xf32>
    %cst_24 = arith.constant 1.000000e+00 : f32
    %40 = vector.broadcast %cst_24 : f32 to vector<1x128xf32>
    %41 = arith.subf %40, %39 : vector<1x128xf32>
    %42 = tpu.concatenate %39, %41 in 0 : vector<1x128xf32>, vector<1x128xf32> -> vector<2x128xf32>
    %c0_25 = arith.constant 0 : index
    %c0_26 = arith.constant 0 : index
    %43 = vector.load %arg3[%c0_25, %c0_26] : memref<2x256xf32, #tpu.memory_space<vmem>>, vector<2x128xf32>
    tpu.vector_store %arg3[%c0_25, %c0_26], %42 {strides = array<i32>} : memref<2x256xf32, #tpu.memory_space<vmem>>, vector<2x128xf32>,
    %c0_27 = arith.constant 0 : index
    %c128 = arith.constant 128 : index
    %44 = vector.load %arg2[%c0_27, %c128] : memref<4x256xf32, #tpu.memory_space<vmem>>, vector<1x128xf32>
    %45 = vector.broadcast %44 : vector<1x128xf32> to vector<24x128xf32>
    %46 = arith.mulf %1, %45 : vector<24x128xf32>
    %47 = arith.addf %9, %46 : vector<24x128xf32>
    %c1_28 = arith.constant 1 : index
    %c128_29 = arith.constant 128 : index
    %48 = vector.load %arg2[%c1_28, %c128_29] : memref<4x256xf32, #tpu.memory_space<vmem>>, vector<1x128xf32>
    %49 = vector.broadcast %48 : vector<1x128xf32> to vector<24x128xf32>
    %50 = arith.mulf %3, %49 : vector<24x128xf32>
    %51 = arith.addf %47, %50 : vector<24x128xf32>
    %c2_30 = arith.constant 2 : index
    %c128_31 = arith.constant 128 : index
    %52 = vector.load %arg2[%c2_30, %c128_31] : memref<4x256xf32, #tpu.memory_space<vmem>>, vector<1x128xf32>
    %53 = vector.broadcast %52 : vector<1x128xf32> to vector<24x128xf32>
    %54 = arith.mulf %5, %53 : vector<24x128xf32>
    %55 = arith.addf %51, %54 : vector<24x128xf32>
    %c3_32 = arith.constant 3 : index
    %c128_33 = arith.constant 128 : index
    %56 = vector.load %arg2[%c3_32, %c128_33] : memref<4x256xf32, #tpu.memory_space<vmem>>, vector<1x128xf32>
    %57 = vector.broadcast %56 : vector<1x128xf32> to vector<24x128xf32>
    %58 = arith.mulf %7, %57 : vector<24x128xf32>
    %59 = arith.addf %55, %58 : vector<24x128xf32>
    %cst_34 = arith.constant 0.000000e+00 : f32
    %60 = vector.broadcast %cst_34 : f32 to vector<24x128xf32>
    %61 = arith.maximumf %59, %60 : vector<24x128xf32>
    %62 = arith.mulf %11, %61 : vector<24x128xf32>
    %cst_35 = arith.constant dense<0.000000e+00> : vector<128xf32>
    %63 = vector.multi_reduction <add>, %62, %cst_35 [0] : vector<24x128xf32> to vector<128xf32>
    %64 = vector.shape_cast %63 : vector<128xf32> to vector<1x128xf32>
    %cst_36 = arith.constant 5.000000e-01 : f32
    %65 = vector.broadcast %cst_36 : f32 to vector<1x128xf32>
    %66 = arith.mulf %65, %64 : vector<1x128xf32>
    %67 = math.tanh %66 : vector<1x128xf32>
    %cst_37 = arith.constant 5.000000e-01 : f32
    %68 = vector.broadcast %cst_37 : f32 to vector<1x128xf32>
    %69 = arith.mulf %68, %67 : vector<1x128xf32>
    %cst_38 = arith.constant 5.000000e-01 : f32
    %70 = vector.broadcast %cst_38 : f32 to vector<1x128xf32>
    %71 = arith.addf %69, %70 : vector<1x128xf32>
    %cst_39 = arith.constant 1.000000e+00 : f32
    %72 = vector.broadcast %cst_39 : f32 to vector<1x128xf32>
    %73 = arith.subf %72, %71 : vector<1x128xf32>
    %74 = tpu.concatenate %71, %73 in 0 : vector<1x128xf32>, vector<1x128xf32> -> vector<2x128xf32>
    %c0_40 = arith.constant 0 : index
    %c128_41 = arith.constant 128 : index
    %75 = vector.load %arg3[%c0_40, %c128_41] : memref<2x256xf32, #tpu.memory_space<vmem>>, vector<2x128xf32>
    tpu.vector_store %arg3[%c0_40, %c128_41], %74 {strides = array<i32>} : memref<2x256xf32, #tpu.memory_space<vmem>>, vector<2x128xf32>,
    return
  }
  func.func @transform_0(%arg0: i32) -> (i32, i32, i32) {
    %c0_i32 = arith.constant 0 : i32
    %c0_i32_0 = arith.constant 0 : i32
    %c0_i32_1 = arith.constant 0 : i32
    %c0_i32_2 = arith.constant 0 : i32
    return %c0_i32, %c0_i32_0, %c0_i32_1 : i32, i32, i32
  }
  func.func @transform_1(%arg0: i32) -> (i32, i32) {
    %c0_i32 = arith.constant 0 : i32
    %c0_i32_0 = arith.constant 0 : i32
    return %c0_i32, %arg0 : i32, i32
  }
  func.func @transform_2(%arg0: i32) -> (i32, i32) {
    %c0_i32 = arith.constant 0 : i32
    %c0_i32_0 = arith.constant 0 : i32
    return %c0_i32, %arg0 : i32, i32
  }
}

</mosaic_0001>

<llo_original>
// kernel: tpu_custom_call.1
$region0: #{tpu_custom_call.1}
  #allocation0 [shape = 'u32[]', space=smem, size = 0x4, offset = 0x4, fixed_abs, tag = 'smem constant byte address 0x4 - core index']
  #allocation1 [shape = 'u32[144,128]{1,0:T(1,128)}', space=vmem, size = 0x12000, scoped, tag = 'internal scratch']
  %s0 = inlined_call_operand.hbm [shape: f32[6,24,128], index: 0, kind: input, shape index: {}]
  %s1 = inlined_call_operand.hbm [shape: f32[4,256], index: 1, kind: input, shape index: {}]
  %s2 = inlined_call_operand.hbm [shape: f32[2,256], index: 2, kind: output, shape index: {}]
  %s3 = sld [smem:[#allocation0]]
  $region26: #{tpu_custom_call.1} parent=0
    _
  %s5 = ssub.s32 1, %s3
  %s6 = scalar_select 0, %s5, %s3
  $region1: #{tpu_custom_call.1} parent=0
    #allocation2 [shape = 'u8[73728]{0}', space=vmem, size = 0x12000, scoped, tag = 'input window, operand 0, single buffered']
    #allocation3 [shape = 's32[1]{0}', space=sflag, size = 0x4, scoped, tag = 'scoped memory for tpu_custom_call.1']
    #allocation4 [shape = 's32[1]{0}', space=sflag, size = 0x4, scoped, tag = 'scoped memory for tpu_custom_call.1']
    #allocation5 [shape = 'u8[4096]{0}', space=vmem, size = 0x1000, scoped, tag = 'input window, operand 1, single buffered']
    #allocation6 [shape = 's32[1]{0}', space=sflag, size = 0x4, scoped, tag = 'scoped memory for tpu_custom_call.1']
    #allocation7 [shape = 'u8[2048]{0}', space=vmem, size = 0x800, scoped, tag = 'output window, operand 0, single buffered']
    %7 = vsyncpa [#allocation3], 0
    %8 = vsyncpa [#allocation6], 0
    %9 = vsyncpa [#allocation4], 0
    // Predicated region
    $region2: #{tpu_custom_call.1} parent=1 // pred_check
      _
    $region3: #{tpu_custom_call.1} parent=1 // pred_check_branch
      %11 = sbr.rel (0) target = $region5
    $region4: #{tpu_custom_call.1} parent=1 // pred_region
      %s13 = ssub.s32 2304, 2304
      %14 = vsyncadd [#allocation3], %s13
      %s15 = sshll.u32 [#allocation2], 4
      %s16 = int_to_ptr.vmem [resolvable:$true] %s15
      %21 = dma.hbm_to_vmem [thread:$0]  %s0, 2304, %s16, [#allocation3], 128, 128, 8
    $region5: #{tpu_custom_call.1} parent=1 // pred_fallthru
      _
    // Predicated region
    $region6: #{tpu_custom_call.1} parent=1 // pred_check
      _
    $region7: #{tpu_custom_call.1} parent=1 // pred_check_branch
      %23 = sbr.rel (0) target = $region9
    $region8: #{tpu_custom_call.1} parent=1 // pred_region
      %s25 = ssub.s32 128, 128
      %26 = vsyncadd [#allocation6], %s25
      %s28 = sshll.u32 [#allocation5], 4
      %s29 = int_to_ptr.vmem [resolvable:$true] %s28
      %31 = dma.hbm_to_vmem [thread:$0]  %s1, 128, %s29, [#allocation6]
    $region9: #{tpu_custom_call.1} parent=1 // pred_fallthru
      _
    // Predicated region
    $region10: #{tpu_custom_call.1} parent=1 // pred_check
      _
    $region11: #{tpu_custom_call.1} parent=1 // pred_check_branch
      %33 = sbr.rel (0) target = $region13
    $region12: #{tpu_custom_call.1} parent=1 // pred_region
      %34 = dma.done [#allocation3], 2304
    $region13: #{tpu_custom_call.1} parent=1 // pred_fallthru
      _
    // Predicated region
    $region14: #{tpu_custom_call.1} parent=1 // pred_check
      _
    $region15: #{tpu_custom_call.1} parent=1 // pred_check_branch
      %36 = sbr.rel (0) target = $region17
    $region16: #{tpu_custom_call.1} parent=1 // pred_region
      %37 = dma.done [#allocation6], 128
    $region17: #{tpu_custom_call.1} parent=1 // pred_fallthru
      _
    %v38 = vld [vmem:[#allocation2] sm:$0xff]
    %v39 = vld [vmem:[#allocation2 + $0x8] sm:$0xff]
    %v40 = vld [vmem:[#allocation2 + $0x10] sm:$0xff]
    %s41 = scalar_lea.vmem [#allocation2], 24
    %v42 = vld [vmem:[%s41] sm:$0xff]
    %v43 = vld [vmem:[%s41 + $0x8] sm:$0xff]
    %v44 = vld [vmem:[%s41 + $0x10] sm:$0xff]
    %s45 = scalar_lea.vmem [#allocation2], 48
    %v46 = vld [vmem:[%s45] sm:$0xff]
    %v47 = vld [vmem:[%s45 + $0x8] sm:$0xff]
    %v48 = vld [vmem:[%s45 + $0x10] sm:$0xff]
    %s49 = scalar_lea.vmem [#allocation2], 72
    %v50 = vld [vmem:[%s49] sm:$0xff]
    %v51 = vld [vmem:[%s49 + $0x8] sm:$0xff]
    %v52 = vld [vmem:[%s49 + $0x10] sm:$0xff]
    %s53 = scalar_lea.vmem [#allocation2], 96
    %v54 = vld [vmem:[%s53] sm:$0xff]
    %v55 = vld [vmem:[%s53 + $0x8] sm:$0xff]
    %v56 = vld [vmem:[%s53 + $0x10] sm:$0xff]
    %s57 = scalar_lea.vmem [#allocation2], 120
    %v58 = vld [vmem:[%s57] sm:$0xff]
    %v59 = vld [vmem:[%s57 + $0x8] sm:$0xff]
    %v60 = vld [vmem:[%s57 + $0x10] sm:$0xff]
    %v61 = vld [vmem:[#allocation5] sm:$0x1]
    %v62 = vlaneseq
    %v63 = vshrl.u32 %v62, 7
    %v64 = vsub.s32 0, %v63
    %v65 = vrot.slane %v61, %v64
    %v66 = vmul.f32 %v38, %v65
    %v67 = vmul.f32 %v39, %v65
    %v68 = vmul.f32 %v40, %v65
    %v69 = vadd.f32 %v54, %v66
    %v70 = vadd.f32 %v55, %v67
    %v71 = vadd.f32 %v56, %v68
    %v72 = vld [vmem:[#allocation5 + $0x1] sm:$0x1]
    %v73 = vlaneseq
    %v74 = vshrl.u32 %v73, 7
    %v75 = vsub.s32 0, %v74
    %v76 = vrot.slane %v72, %v75
    %v77 = vmul.f32 %v42, %v76
    %v78 = vmul.f32 %v43, %v76
    %v79 = vmul.f32 %v44, %v76
    %v80 = vadd.f32 %v69, %v77
    %v81 = vadd.f32 %v70, %v78
    %v82 = vadd.f32 %v71, %v79
    %v83 = vld [vmem:[#allocation5 + $0x2] sm:$0x1]
    %v84 = vlaneseq
    %v85 = vshrl.u32 %v84, 7
    %v86 = vsub.s32 0, %v85
    %v87 = vrot.slane %v83, %v86
    %v88 = vmul.f32 %v46, %v87
    %v89 = vmul.f32 %v47, %v87
    %v90 = vmul.f32 %v48, %v87
    %v91 = vadd.f32 %v80, %v88
    %v92 = vadd.f32 %v81, %v89
    %v93 = vadd.f32 %v82, %v90
    %v94 = vld [vmem:[#allocation5 + $0x3] sm:$0x1]
    %v95 = vlaneseq
    %v96 = vshrl.u32 %v95, 7
    %v97 = vsub.s32 0, %v96
    %v98 = vrot.slane %v94, %v97
    %v99 = vmul.f32 %v50, %v98
    %v100 = vmul.f32 %v51, %v98
    %v101 = vmul.f32 %v52, %v98
    %v102 = vadd.f32 %v91, %v99
    %v103 = vadd.f32 %v92, %v100
    %v104 = vadd.f32 %v93, %v101
    %v105 = vmax.f32 %v102, 0.0
    %v106 = vmax.f32 %v103, 0.0
    %v107 = vmax.f32 %v104, 0.0
    %v108 = vmul.f32 %v58, %v105
    %v109 = vmul.f32 %v59, %v106
    %v110 = vmul.f32 %v60, %v107
    %v111 = vadd.f32 %v108, %v109
    %v112 = vadd.f32 %v111, %v110
    %v113 = vrot.slane %v112, 4
    %v114 = vadd.f32 %v112, %v113
    %v115 = vrot.slane %v114, 2
    %v116 = vadd.f32 %v114, %v115
    %v117 = vrot.slane %v116, 1
    %v118 = vadd.f32 %v116, %v117
    %v119 = vmul.f32 %v118, 0.5
    %v120 = vtanh.pop %v119
    %v121 = vmul.f32 %v120, 0.5
    %v122 = vadd.f32 %v121, 0.5
    %v123 = vsub.f32 1.0, %v122
    %vm124 = vcmask 1040384
    %v125 = vsel %vm124, %v122, %v123
    %126 = vst [vmem:[#allocation7] sm:$0x3] %v125
    %v127 = vld [vmem:[#allocation5 + $0x4] sm:$0x1]
    %v128 = vlaneseq
    %v129 = vshrl.u32 %v128, 7
    %v130 = vsub.s32 0, %v129
    %v131 = vrot.slane %v127, %v130
    %v132 = vmul.f32 %v38, %v131
    %v133 = vmul.f32 %v39, %v131
    %v134 = vmul.f32 %v40, %v131
    %v135 = vadd.f32 %v54, %v132
    %v136 = vadd.f32 %v55, %v133
    %v137 = vadd.f32 %v56, %v134
    %v138 = vld [vmem:[#allocation5 + $0x5] sm:$0x1]
    %v139 = vlaneseq
    %v140 = vshrl.u32 %v139, 7
    %v141 = vsub.s32 0, %v140
    %v142 = vrot.slane %v138, %v141
    %v143 = vmul.f32 %v42, %v142
    %v144 = vmul.f32 %v43, %v142
    %v145 = vmul.f32 %v44, %v142
    %v146 = vadd.f32 %v135, %v143
    %v147 = vadd.f32 %v136, %v144
    %v148 = vadd.f32 %v137, %v145
    %v149 = vld [vmem:[#allocation5 + $0x6] sm:$0x1]
    %v150 = vlaneseq
    %v151 = vshrl.u32 %v150, 7
    %v152 = vsub.s32 0, %v151
    %v153 = vrot.slane %v149, %v152
    %v154 = vmul.f32 %v46, %v153
    %v155 = vmul.f32 %v47, %v153
    %v156 = vmul.f32 %v48, %v153
    %v157 = vadd.f32 %v146, %v154
    %v158 = vadd.f32 %v147, %v155
    %v159 = vadd.f32 %v148, %v156
    %v160 = vld [vmem:[#allocation5 + $0x7] sm:$0x1]
    %v161 = vlaneseq
    %v162 = vshrl.u32 %v161, 7
    %v163 = vsub.s32 0, %v162
    %v164 = vrot.slane %v160, %v163
    %v165 = vmul.f32 %v50, %v164
    %v166 = vmul.f32 %v51, %v164
    %v167 = vmul.f32 %v52, %v164
    %v168 = vadd.f32 %v157, %v165
    %v169 = vadd.f32 %v158, %v166
    %v170 = vadd.f32 %v159, %v167
    %v171 = vmax.f32 %v168, 0.0
    %v172 = vmax.f32 %v169, 0.0
    %v173 = vmax.f32 %v170, 0.0
    %v174 = vmul.f32 %v58, %v171
    %v175 = vmul.f32 %v59, %v172
    %v176 = vmul.f32 %v60, %v173
    %v177 = vadd.f32 %v174, %v175
    %v178 = vadd.f32 %v177, %v176
    %v179 = vrot.slane %v178, 4
    %v180 = vadd.f32 %v178, %v179
    %v181 = vrot.slane %v180, 2
    %v182 = vadd.f32 %v180, %v181
    %v183 = vrot.slane %v182, 1
    %v184 = vadd.f32 %v182, %v183
    %v185 = vmul.f32 %v184, 0.5
    %v186 = vtanh.pop %v185
    %v187 = vmul.f32 %v186, 0.5
    %v188 = vadd.f32 %v187, 0.5
    %v189 = vsub.f32 1.0, %v188
    %v190 = vsel %vm124, %v188, %v189
    %191 = vst [vmem:[#allocation7 + $0x2] sm:$0x3] %v190
    // Predicated region
    $region18: #{tpu_custom_call.1} parent=1 // pred_check
      _
    $region19: #{tpu_custom_call.1} parent=1 // pred_check_branch
      %193 = sbr.rel (0) target = $region21
    $region20: #{tpu_custom_call.1} parent=1 // pred_region
      %s195 = ssub.s32 64, 64
      %196 = vsyncadd [#allocation4], %s195
      %s198 = sshll.u32 [#allocation7], 4
      %s199 = int_to_ptr.vmem [resolvable:$true] %s198
      %201 = dma.vmem_to_hbm [thread:$0]  %s199, 64, %s2, [#allocation4]
    $region21: #{tpu_custom_call.1} parent=1 // pred_fallthru
      _
    // Predicated region
    $region22: #{tpu_custom_call.1} parent=1 // pred_check
      _
    $region23: #{tpu_custom_call.1} parent=1 // pred_check_branch
      %203 = sbr.rel (0) target = $region25
    $region24: #{tpu_custom_call.1} parent=1 // pred_region
      %204 = dma.done [#allocation4], 64
    $region25: #{tpu_custom_call.1} parent=1 // pred_fallthru
      _
    %205 = vsyncpa [#allocation3], 1
    %206 = vsyncpa [#allocation6], 1
    %207 = vsyncpa [#allocation4], 1

</llo_original>
